<compile_context>
chip_gen: v7x
topology: tpu7x:2x2x1
jax: 0.10.0
libtpu: 0.0.40
codegen_flags: <defaults>
</compile_context>

<pallas_src>
import numpy as np
import jax
import jax.numpy as jnp
from jax.experimental import pallas as pl
from jax.experimental.pallas import tpu as pltpu


def _vmem_specs(n):
    return [pl.BlockSpec(memory_space=pltpu.MemorySpace.VMEM) for _ in range(n)]


# ------------------------- one-shot precompute kernel -------------------------
def _precompute_kernel(enc_ref, emb_ref,
                       w_h_ref, b_h_ref, w_c_ref, b_c_ref,
                       w_ea_ref, b_ea_ref, w_ihe_ref, b_lstm_ref,
                       h0_out, c0_out, att1_out, embp_out):
    enc = enc_ref[...]                              # (B, P, E)
    B, P, E = enc.shape

    # init_h / init_c on the mean-pooled encoder output
    mean = jnp.mean(enc, axis=1)                    # (B, E)
    h0_out[...] = jnp.dot(mean, w_h_ref[...],
                          preferred_element_type=jnp.float32) + b_h_ref[...]
    c0_out[...] = jnp.dot(mean, w_c_ref[...],
                          preferred_element_type=jnp.float32) + b_c_ref[...]

    # encoder half of the additive attention (time-invariant, hoisted)
    A = w_ea_ref.shape[1]
    att1 = (jnp.dot(enc.reshape(B * P, E), w_ea_ref[...],
                    preferred_element_type=jnp.float32) + b_ea_ref[...])
    att1_out[...] = att1.reshape(B, P, A)

    # embedding half of the LSTM input projection for ALL steps (+ lstm bias)
    emb = emb_ref[...]                              # (T, B, Emb)
    T, _, Emb = emb.shape
    G = w_ihe_ref.shape[1]
    embp = (jnp.dot(emb.reshape(T * B, Emb), w_ihe_ref[...],
                    preferred_element_type=jnp.float32) + b_lstm_ref[...])
    embp_out[...] = embp.reshape(T, B, G)


def precompute(enc, emb_steps, p):
    B, P, _ = enc.shape
    Tn = emb_steps.shape[0]
    D = p["init_h_w"].shape[1]
    A = p["enc_att_w"].shape[1]
    G = p["lstm_w_ih_emb"].shape[1]
    return pl.pallas_call(
        _precompute_kernel,
        out_shape=(jax.ShapeDtypeStruct((B, D), jnp.float32),
                   jax.ShapeDtypeStruct((B, D), jnp.float32),
                   jax.ShapeDtypeStruct((B, P, A), jnp.float32),
                   jax.ShapeDtypeStruct((Tn, B, G), jnp.float32)),
        in_specs=_vmem_specs(10),
        out_specs=tuple(_vmem_specs(4)),
    )(enc, emb_steps,
      p["init_h_w"], p["init_h_b"], p["init_c_w"], p["init_c_b"],
      p["enc_att_w"], p["enc_att_b"], p["lstm_w_ih_emb"], p["lstm_b"])


# ----------------------- fused time-loop decode kernel ------------------------
def _fused_step_kernel(bsz_ref,                                   # SMEM prefetch
                       att1_ref, enc_ref, embp_ref, h0_ref, c0_ref,
                       w_da_ref, b_da_ref, w_fa_ref, b_fa_ref,
                       w_fb_ref, b_fb_ref,
                       w_iha_ref, w_hh_ref,
                       w_out_ref, b_out_ref,
                       preds_out, alpha_out,
                       h_sc, c_sc):
    t = pl.program_id(0)

    @pl.when(t == 0)
    def _():
        h_sc[...] = h0_ref[...]
        c_sc[...] = c0_ref[...]

    h = h_sc[...]                      # (B, D) f32
    c = c_sc[...]                      # (B, D) f32
    att1 = att1_ref[...]               # (B, P, A) f32 (precomputed enc_att)
    enc = enc_ref[...]                 # (B, P, E) f32
    emb_g = embp_ref[0]                # (B, 4D) f32 (emb @ W_ih_emb + b_lstm)
    B, P, A = att1.shape
    D = h.shape[1]

    h_b = h.astype(jnp.bfloat16)

    # --- additive attention: full_att(relu(att1 + dec_att(h)[:,None,:])) ---
    att2 = jnp.dot(h_b, w_da_ref[...],
                   preferred_element_type=jnp.float32) + b_da_ref[...]       # (B, A)
    att = jnp.maximum(att1 + att2[:, None, :], 0.0)                          # (B, P, A)
    scores = (jnp.sum(att * w_fa_ref[...].reshape(1, 1, A), axis=-1)
              + b_fa_ref[...])                                               # (B, P)

    # softmax over pixels
    scores = scores - jnp.max(scores, axis=1, keepdims=True)
    exp_s = jnp.exp(scores)
    alpha = exp_s / jnp.sum(exp_s, axis=1, keepdims=True)                    # (B, P)

    # attention-weighted encoding as a batched matmul (MXU, flash-style einsum)
    awe = jnp.einsum('bqp,bpe->bqe', alpha[:, None, :], enc,
                     preferred_element_type=jnp.float32)[:, 0, :]            # (B, E)

    # --- sigmoid gate on attention-weighted encoding ---
    gate = jax.nn.sigmoid(
        jnp.dot(h_b, w_fb_ref[...],
                preferred_element_type=jnp.float32) + b_fb_ref[...])
    awe = gate * awe

    # --- LSTMCell gates; embedding half + bias already folded into emb_g ---
    gates = (emb_g
             + jnp.dot(awe.astype(jnp.bfloat16), w_iha_ref[...],
                       preferred_element_type=jnp.float32)
             + jnp.dot(h_b, w_hh_ref[...],
                       preferred_element_type=jnp.float32))
    i_g = jax.nn.sigmoid(gates[:, 0 * D:1 * D])
    f_g = jax.nn.sigmoid(gates[:, 1 * D:2 * D])
    g_g = jnp.tanh(gates[:, 2 * D:3 * D])
    o_g = jax.nn.sigmoid(gates[:, 3 * D:4 * D])
    c_new = f_g * c + i_g * g_g
    h_new = o_g * jnp.tanh(c_new)

    # --- vocab projection ---
    # TODO(synk): nn.Dropout(0.5) before the projection is identity in eval
    # mode; training-mode dropout RNG is omitted.
    preds = jnp.dot(h_new.astype(jnp.bfloat16), w_out_ref[...],
                    preferred_element_type=jnp.float32) + b_out_ref[...]

    h_sc[...] = h_new
    c_sc[...] = c_new

    # PyTorch only writes rows < batch_size_t at step t (lengths are sorted
    # descending, so those rows never affect active rows).
    bsz = bsz_ref[t]
    row_mask = jax.lax.broadcasted_iota(jnp.int32, (B, 1), 0) < bsz
    preds_out[0, :, :] = jnp.where(row_mask, preds, 0.0)
    alpha_out[0, :, :] = jnp.where(row_mask, alpha, 0.0)


def fused_decode(enc, att1, emb_proj, h0, c0, bsz_t, p):
    B, P, E = enc.shape
    A = att1.shape[2]
    D = h0.shape[1]
    G = emb_proj.shape[2]
    V = p["out_w"].shape[1]
    nsteps = emb_proj.shape[0]

    # bf16 weight copies for MXU throughput / halved VMEM residency
    # (accumulation stays f32 via preferred_element_type).
    w_da = p["dec_att_w"].astype(jnp.bfloat16)
    w_fb = p["f_beta_w"].astype(jnp.bfloat16)
    w_iha = p["lstm_w_ih_awe"].astype(jnp.bfloat16)
    w_hh = p["lstm_w_hh"].astype(jnp.bfloat16)
    w_out = p["out_w"].astype(jnp.bfloat16)

    # resident (time-invariant) blocks: constant index_map -> DMA'd once
    c2 = lambda s: pl.BlockSpec(s, lambda t, b: (0, 0))
    c3 = lambda s: pl.BlockSpec(s, lambda t, b: (0, 0, 0))

    grid_spec = pltpu.PrefetchScalarGridSpec(
        num_scalar_prefetch=1,
        grid=(nsteps,),
        in_specs=[
            c3((B, P, A)),                                    # att1 (resident)
            c3((B, P, E)),                                    # enc (resident)
            pl.BlockSpec((1, B, G), lambda t, b: (t, 0, 0)),  # emb gates, step t
            c2((B, D)), c2((B, D)),                           # h0, c0
            c2((D, A)), c2((1, A)),                           # dec_att W, b
            c2((1, A)), c2((1, 1)),                           # full_att W, b
            c2((D, E)), c2((1, E)),                           # f_beta W, b
            c2((E, G)), c2((D, G)),                           # lstm W_ih_awe, W_hh
            c2((D, V)), c2((1, V)),                           # out W, b
        ],
        out_specs=(
            pl.BlockSpec((1, B, V), lambda t, b: (t, 0, 0)),  # predictions[t]
            pl.BlockSpec((1, B, P), lambda t, b: (t, 0, 0)),  # alphas[t]
        ),
        scratch_shapes=[pltpu.VMEM((B, D), jnp.float32),      # h carried in VMEM
                        pltpu.VMEM((B, D), jnp.float32)],     # c carried in VMEM
    )

    preds_t, alpha_t = pl.pallas_call(
        _fused_step_kernel,
        out_shape=(jax.ShapeDtypeStruct((nsteps, B, V), jnp.float32),
                   jax.ShapeDtypeStruct((nsteps, B, P), jnp.float32)),
        grid_spec=grid_spec,
        compiler_params=pltpu.CompilerParams(
            dimension_semantics=("arbitrary",)),
    )(bsz_t, att1, enc, emb_proj, h0, c0,
      w_da, p["dec_att_b"], p["full_att_w"], p["full_att_b"],
      w_fb, p["f_beta_b"],
      w_iha, w_hh,
      w_out, p["out_b"])
    return preds_t, alpha_t


# --------------------------------- parameters --------------------------------
def init_params(key, embed_dim, decoder_dim, vocab_size, encoder_dim, attention_dim):
    ks = jax.random.split(key, 20)
    s = 0.1

    def lin(k, n_in, n_out):
        kw, kb = jax.random.split(k)
        return (s * jax.random.normal(kw, (n_in, n_out), jnp.float32),
                s * jax.random.normal(kb, (1, n_out), jnp.float32))

    enc_att_w, enc_att_b = lin(ks[0], encoder_dim, attention_dim)
    dec_att_w, dec_att_b = lin(ks[1], decoder_dim, attention_dim)
    full_att_w = s * jax.random.normal(ks[2], (1, attention_dim), jnp.float32)
    full_att_b = s * jax.random.normal(ks[3], (1, 1), jnp.float32)
    f_beta_w, f_beta_b = lin(ks[4], decoder_dim, encoder_dim)
    init_h_w, init_h_b = lin(ks[5], encoder_dim, decoder_dim)
    init_c_w, init_c_b = lin(ks[6], encoder_dim, decoder_dim)
    out_w, out_b = lin(ks[7], decoder_dim, vocab_size)
    embedding = s * jax.random.normal(ks[8], (vocab_size, embed_dim), jnp.float32)
    # LSTMCell: W_ih (embed+enc, 4D) split into embedding / attention halves,
    # W_hh (D, 4D), combined bias b_ih + b_hh.  Gate order: i, f, g, o.
    lstm_w_ih_emb = s * jax.random.normal(ks[9], (embed_dim, 4 * decoder_dim), jnp.float32)
    lstm_w_ih_awe = s * jax.random.normal(ks[10], (encoder_dim, 4 * decoder_dim), jnp.float32)
    lstm_w_hh = s * jax.random.normal(ks[11], (decoder_dim, 4 * decoder_dim), jnp.float32)
    lstm_b = s * jax.random.normal(ks[12], (1, 4 * decoder_dim), jnp.float32)

    return dict(
        embedding=embedding,
        enc_att_w=enc_att_w, enc_att_b=enc_att_b,
        dec_att_w=dec_att_w, dec_att_b=dec_att_b,
        full_att_w=full_att_w, full_att_b=full_att_b,
        f_beta_w=f_beta_w, f_beta_b=f_beta_b,
        init_h_w=init_h_w, init_h_b=init_h_b,
        init_c_w=init_c_w, init_c_b=init_c_b,
        lstm_w_ih_emb=lstm_w_ih_emb, lstm_w_ih_awe=lstm_w_ih_awe,
        lstm_w_hh=lstm_w_hh, lstm_b=lstm_b,
        out_w=out_w, out_b=out_b,
    )


# --------------------------------- forward -----------------------------------
def decoder_forward(params, features, captions, caption_lengths):
    B = features.shape[0]
    E = features.shape[-1]
    enc = features.reshape(B, -1, E)                       # (B, P, E)
    P = enc.shape[1]
    V = params["out_w"].shape[1]

    lengths = np.asarray(caption_lengths)
    sort_ind = np.argsort(-lengths, kind="stable")         # descending sort
    sorted_lengths = lengths[sort_ind]
    sort_ind_j = jnp.asarray(sort_ind, dtype=jnp.int32)

    enc = enc[sort_ind_j]                                              # (B, P, E)
    encoded_captions = jnp.transpose(captions, (1, 0))[sort_ind_j]     # (B, T)
    embeddings = jnp.take(params["embedding"], encoded_captions, axis=0)  # (B, T, Emb)

    decode_lengths = (sorted_lengths - 1).tolist()
    nsteps = max(decode_lengths) - 1                       # matches the PyTorch loop
    if nsteps < 1:
        return (jnp.zeros((B, 0, V), jnp.float32), encoded_captions,
                jnp.asarray(sorted_lengths, dtype=jnp.int32),
                jnp.zeros((B, 0, P), jnp.float32), sort_ind_j)

    bsz_t = jnp.asarray([sum(int(l > t) for l in decode_lengths) for t in range(nsteps)],
                        dtype=jnp.int32)

    # time-leading layout keeps the last two block dims full (lane-dense tiles)
    emb_steps = jnp.transpose(embeddings[:, :nsteps, :], (1, 0, 2))    # (T', B, Emb)

    h0, c0, att1, emb_proj = precompute(enc, emb_steps, params)
    preds_t, alpha_t = fused_decode(enc, att1, emb_proj, h0, c0, bsz_t, params)

    predictions = jnp.transpose(preds_t, (1, 0, 2))        # (B, nsteps, V)
    alphas = jnp.transpose(alpha_t, (1, 0, 2))             # (B, nsteps, P)

    return (predictions, encoded_captions,
            jnp.asarray(sorted_lengths, dtype=jnp.int32), alphas, sort_ind_j)


# ----------------------------------- main -------------------------------------
if __name__ == "__main__":
    embed_dim, decoder_dim, vocab_size, encoder_dim, attention_dim = 32, 32, 64, 32, 32
    B, Hs, Ws, T = 4, 4, 4, 8

    key = jax.random.PRNGKey(0)
    kp, kf, kc = jax.random.split(key, 3)

    params = init_params(kp, embed_dim, decoder_dim, vocab_size, encoder_dim, attention_dim)
    features = jax.random.normal(kf, (B, Hs, Ws, encoder_dim), jnp.float32)
    captions = jax.random.randint(kc, (T, B), 0, vocab_size, dtype=jnp.int32)   # (T, B)
    caption_lengths = [8, 6, 7, 5]

    preds, enc_caps, sorted_lens, alphas, sort_ind = decoder_forward(
        params, features, captions, caption_lengths)

    jax.block_until_ready((preds, enc_caps, sorted_lens, alphas, sort_ind))
    assert preds.shape == (B, max(l - 1 for l in caption_lengths) - 1, vocab_size)
    assert alphas.shape == (B, preds.shape[1], Hs * Ws)
    print("KERNEL_OK")
</pallas_src>

<mosaic_0001>
module attributes {stable_mosaic.version = 11 : i64} {
  func.func @_precompute_kernel(%arg0: memref<4x16x32xf32, #tpu.memory_space<vmem>>, %arg1: memref<6x4x32xf32, #tpu.memory_space<vmem>>, %arg2: memref<32x32xf32, #tpu.memory_space<vmem>>, %arg3: memref<1x32xf32, #tpu.memory_space<vmem>>, %arg4: memref<32x32xf32, #tpu.memory_space<vmem>>, %arg5: memref<1x32xf32, #tpu.memory_space<vmem>>, %arg6: memref<32x32xf32, #tpu.memory_space<vmem>>, %arg7: memref<1x32xf32, #tpu.memory_space<vmem>>, %arg8: memref<32x128xf32, #tpu.memory_space<vmem>>, %arg9: memref<1x128xf32, #tpu.memory_space<vmem>>, %arg10: memref<4x32xf32, #tpu.memory_space<vmem>>, %arg11: memref<4x32xf32, #tpu.memory_space<vmem>>, %arg12: memref<4x16x32xf32, #tpu.memory_space<vmem>>, %arg13: memref<6x4x128xf32, #tpu.memory_space<vmem>>) attributes {dimension_semantics = [], scalar_prefetch = 0 : i64, scratch_operands = 0 : i64, tpu.core_type = #tpu.core_type<tc>} {
    %c0 = arith.constant 0 : index
    %c0_0 = arith.constant 0 : index
    %c0_1 = arith.constant 0 : index
    %0 = vector.load %arg0[%c0, %c0_0, %c0_1] : memref<4x16x32xf32, #tpu.memory_space<vmem>>, vector<4x16x32xf32>
    %cst = arith.constant dense<0.000000e+00> : vector<4x32xf32>
    %1 = vector.multi_reduction <add>, %0, %cst [1] : vector<4x16x32xf32> to vector<4x32xf32>
    %cst_2 = arith.constant 1.600000e+01 : f32
    %2 = vector.broadcast %cst_2 : f32 to vector<4x32xf32>
    %3 = arith.divf %1, %2 : vector<4x32xf32>
    %c0_3 = arith.constant 0 : index
    %c0_4 = arith.constant 0 : index
    %4 = vector.load %arg2[%c0_3, %c0_4] : memref<32x32xf32, #tpu.memory_space<vmem>>, vector<32x32xf32>
    %cst_5 = arith.constant dense<0.000000e+00> : vector<4x32xf32>
    %5 = tpu.matmul %3, %4, %cst_5 {dimension_numbers = #tpu.dot_dimension_numbers<[1], [0], [0], [1], [0, 0, 1, 1], [], []>} : vector<4x32xf32>, vector<32x32xf32>, vector<4x32xf32> -> vector<4x32xf32>
    %c0_6 = arith.constant 0 : index
    %c0_7 = arith.constant 0 : index
    %6 = vector.load %arg3[%c0_6, %c0_7] : memref<1x32xf32, #tpu.memory_space<vmem>>, vector<1x32xf32>
    %7 = vector.broadcast %6 : vector<1x32xf32> to vector<4x32xf32>
    %8 = arith.addf %5, %7 : vector<4x32xf32>
    %c0_8 = arith.constant 0 : index
    %c0_9 = arith.constant 0 : index
    %9 = vector.load %arg10[%c0_8, %c0_9] : memref<4x32xf32, #tpu.memory_space<vmem>>, vector<4x32xf32>
    tpu.vector_store %arg10[%c0_8, %c0_9], %8 {strides = array<i32>} : memref<4x32xf32, #tpu.memory_space<vmem>>, vector<4x32xf32>,
    %c0_10 = arith.constant 0 : index
    %c0_11 = arith.constant 0 : index
    %10 = vector.load %arg4[%c0_10, %c0_11] : memref<32x32xf32, #tpu.memory_space<vmem>>, vector<32x32xf32>
    %cst_12 = arith.constant dense<0.000000e+00> : vector<4x32xf32>
    %11 = tpu.matmul %3, %10, %cst_12 {dimension_numbers = #tpu.dot_dimension_numbers<[1], [0], [0], [1], [0, 0, 1, 1], [], []>} : vector<4x32xf32>, vector<32x32xf32>, vector<4x32xf32> -> vector<4x32xf32>
    %c0_13 = arith.constant 0 : index
    %c0_14 = arith.constant 0 : index
    %12 = vector.load %arg5[%c0_13, %c0_14] : memref<1x32xf32, #tpu.memory_space<vmem>>, vector<1x32xf32>
    %13 = vector.broadcast %12 : vector<1x32xf32> to vector<4x32xf32>
    %14 = arith.addf %11, %13 : vector<4x32xf32>
    %c0_15 = arith.constant 0 : index
    %c0_16 = arith.constant 0 : index
    %15 = vector.load %arg11[%c0_15, %c0_16] : memref<4x32xf32, #tpu.memory_space<vmem>>, vector<4x32xf32>
    tpu.vector_store %arg11[%c0_15, %c0_16], %14 {strides = array<i32>} : memref<4x32xf32, #tpu.memory_space<vmem>>, vector<4x32xf32>,
    %16 = vector.shape_cast %0 : vector<4x16x32xf32> to vector<64x32xf32>
    %c0_17 = arith.constant 0 : index
    %c0_18 = arith.constant 0 : index
    %17 = vector.load %arg6[%c0_17, %c0_18] : memref<32x32xf32, #tpu.memory_space<vmem>>, vector<32x32xf32>
    %cst_19 = arith.constant dense<0.000000e+00> : vector<64x32xf32>
    %18 = tpu.matmul %16, %17, %cst_19 {dimension_numbers = #tpu.dot_dimension_numbers<[1], [0], [0], [1], [0, 0, 1, 1], [], []>} : vector<64x32xf32>, vector<32x32xf32>, vector<64x32xf32> -> vector<64x32xf32>
    %c0_20 = arith.constant 0 : index
    %c0_21 = arith.constant 0 : index
    %19 = vector.load %arg7[%c0_20, %c0_21] : memref<1x32xf32, #tpu.memory_space<vmem>>, vector<1x32xf32>
    %20 = vector.broadcast %19 : vector<1x32xf32> to vector<64x32xf32>
    %21 = arith.addf %18, %20 : vector<64x32xf32>
    %22 = vector.shape_cast %21 : vector<64x32xf32> to vector<4x16x32xf32>
    %c0_22 = arith.constant 0 : index
    %c0_23 = arith.constant 0 : index
    %c0_24 = arith.constant 0 : index
    %23 = vector.load %arg12[%c0_22, %c0_23, %c0_24] : memref<4x16x32xf32, #tpu.memory_space<vmem>>, vector<4x16x32xf32>
    tpu.vector_store %arg12[%c0_22, %c0_23, %c0_24], %22 {strides = array<i32>} : memref<4x16x32xf32, #tpu.memory_space<vmem>>, vector<4x16x32xf32>,
    %c0_25 = arith.constant 0 : index
    %c0_26 = arith.constant 0 : index
    %c0_27 = arith.constant 0 : index
    %24 = vector.load %arg1[%c0_25, %c0_26, %c0_27] : memref<6x4x32xf32, #tpu.memory_space<vmem>>, vector<6x4x32xf32>
    %25 = vector.shape_cast %24 : vector<6x4x32xf32> to vector<24x32xf32>
    %c0_28 = arith.constant 0 : index
    %c0_29 = arith.constant 0 : index
    %26 = vector.load %arg8[%c0_28, %c0_29] : memref<32x128xf32, #tpu.memory_space<vmem>>, vector<32x128xf32>
    %cst_30 = arith.constant dense<0.000000e+00> : vector<24x128xf32>
    %27 = tpu.matmul %25, %26, %cst_30 {dimension_numbers = #tpu.dot_dimension_numbers<[1], [0], [0], [1], [0, 0, 1, 1], [], []>} : vector<24x32xf32>, vector<32x128xf32>, vector<24x128xf32> -> vector<24x128xf32>
    %c0_31 = arith.constant 0 : index
    %c0_32 = arith.constant 0 : index
    %28 = vector.load %arg9[%c0_31, %c0_32] : memref<1x128xf32, #tpu.memory_space<vmem>>, vector<1x128xf32>
    %29 = vector.broadcast %28 : vector<1x128xf32> to vector<24x128xf32>
    %30 = arith.addf %27, %29 : vector<24x128xf32>
    %31 = vector.shape_cast %30 : vector<24x128xf32> to vector<6x4x128xf32>
    %c0_33 = arith.constant 0 : index
    %c0_34 = arith.constant 0 : index
    %c0_35 = arith.constant 0 : index
    %32 = vector.load %arg13[%c0_33, %c0_34, %c0_35] : memref<6x4x128xf32, #tpu.memory_space<vmem>>, vector<6x4x128xf32>
    tpu.vector_store %arg13[%c0_33, %c0_34, %c0_35], %31 {strides = array<i32>} : memref<6x4x128xf32, #tpu.memory_space<vmem>>, vector<6x4x128xf32>,
    return
  }
}

</mosaic_0001>

<llo_original>
// kernel: tpu_custom_call.1
$region0: #{tpu_custom_call.1}
  #allocation0 [shape = 'u32[]', space=smem, size = 0x4, offset = 0x4, fixed_abs, tag = 'smem constant byte address 0x4 - core index']
  #allocation1 [shape = 'u32[144,128]{1,0:T(1,128)}', space=vmem, size = 0x12000, scoped, tag = 'internal scratch']
  %s0 = inlined_call_operand.hbm [shape: f32[4,16,32], index: 0, kind: input, shape index: {}]
  %s1 = inlined_call_operand.hbm [shape: f32[6,4,32], index: 1, kind: input, shape index: {}]
  %s2 = inlined_call_operand.hbm [shape: f32[32,32], index: 2, kind: input, shape index: {}]
  %s3 = inlined_call_operand.vmem [shape: f32[1,32], index: 3, kind: input, shape index: {}]
  %s4 = inlined_call_operand.hbm [shape: f32[32,32], index: 4, kind: input, shape index: {}]
  %s5 = inlined_call_operand.vmem [shape: f32[1,32], index: 5, kind: input, shape index: {}]
  %s6 = inlined_call_operand.hbm [shape: f32[32,32], index: 6, kind: input, shape index: {}]
  %s7 = inlined_call_operand.vmem [shape: f32[1,32], index: 7, kind: input, shape index: {}]
  %s8 = inlined_call_operand.hbm [shape: f32[32,128], index: 8, kind: input, shape index: {}]
  %s9 = inlined_call_operand.vmem [shape: f32[1,128], index: 9, kind: input, shape index: {}]
  %s10 = inlined_call_operand.hbm [shape: f32[4,32], index: 10, kind: output, shape index: {0}]
  %s11 = inlined_call_operand.hbm [shape: f32[4,32], index: 11, kind: output, shape index: {1}]
  %s12 = inlined_call_operand.hbm [shape: f32[4,16,32], index: 12, kind: output, shape index: {2}]
  %s13 = inlined_call_operand.hbm [shape: f32[6,4,128], index: 13, kind: output, shape index: {3}]
  %14 = xla_tuple %s10, %s11, %s12, %s13
  %s15 = sld [smem:[#allocation0]]
  $region98: #{tpu_custom_call.1} parent=0
    _
  %s17 = ssub.s32 1, %s15
  %s18 = scalar_select 0, %s17, %s15
  $region1: #{tpu_custom_call.1} parent=0
    #allocation2 [shape = 'u8[32768]{0}', space=vmem, size = 0x8000, scoped, tag = 'input window, operand 0, single buffered']
    #allocation3 [shape = 's32[1]{0}', space=sflag, size = 0x4, scoped, tag = 'scoped memory for tpu_custom_call.1']
    #allocation4 [shape = 's32[1]{0}', space=sflag, size = 0x4, scoped, tag = 'scoped memory for tpu_custom_call.1']
    #allocation5 [shape = 'u8[12288]{0}', space=vmem, size = 0x3000, scoped, tag = 'input window, operand 1, single buffered']
    #allocation6 [shape = 's32[1]{0}', space=sflag, size = 0x4, scoped, tag = 'scoped memory for tpu_custom_call.1']
    #allocation7 [shape = 'u8[16384]{0}', space=vmem, size = 0x4000, scoped, tag = 'input window, operand 2, single buffered']
    #allocation8 [shape = 'u8[16384]{0}', space=vmem, size = 0x4000, scoped, tag = 'input window, operand 4, single buffered']
    #allocation9 [shape = 's32[1]{0}', space=sflag, size = 0x4, scoped, tag = 'scoped memory for tpu_custom_call.1']
    #allocation10 [shape = 'u8[16384]{0}', space=vmem, size = 0x4000, scoped, tag = 'input window, operand 6, single buffered']
    #allocation11 [shape = 'u8[16384]{0}', space=vmem, size = 0x4000, scoped, tag = 'input window, operand 8, single buffered']
    #allocation12 [shape = 's32[1]{0}', space=sflag, size = 0x4, scoped, tag = 'scoped memory for tpu_custom_call.1']
    #allocation13 [shape = 'u8[2048]{0}', space=vmem, size = 0x800, scoped, tag = 'output window, operand 0, single buffered']
    #allocation14 [shape = 'u8[2048]{0}', space=vmem, size = 0x800, scoped, tag = 'output window, operand 1, single buffered']
    #allocation15 [shape = 's32[1]{0}', space=sflag, size = 0x4, scoped, tag = 'scoped memory for tpu_custom_call.1']
    #allocation16 [shape = 'u8[32768]{0}', space=vmem, size = 0x8000, scoped, tag = 'output window, operand 2, single buffered']
    #allocation17 [shape = 'u8[12288]{0}', space=vmem, size = 0x3000, scoped, tag = 'output window, operand 3, single buffered']
    #allocation18 [shape = 's32[1]{0}', space=sflag, size = 0x4, scoped, tag = 'scoped memory for tpu_custom_call.1']
    %19 = vsyncpa [#allocation3], 0
    %20 = vsyncpa [#allocation6], 0
    %21 = vsyncpa [#allocation9], 0
    %22 = vsyncpa [#allocation12], 0
    %23 = vsyncpa [#allocation4], 0
    %24 = vsyncpa [#allocation15], 0
    %25 = vsyncpa [#allocation18], 0
    // Predicated region
    $region2: #{tpu_custom_call.1} parent=1 // pred_check
      _
    $region3: #{tpu_custom_call.1} parent=1 // pred_check_branch
      %27 = sbr.rel (0) target = $region5
    $region4: #{tpu_custom_call.1} parent=1 // pred_region
      %s29 = ssub.s32 1024, 1024
      %30 = vsyncadd [#allocation3], %s29
      %s31 = sshll.u32 [#allocation2], 4
      %s32 = int_to_ptr.vmem [resolvable:$true] %s31
      %37 = dma.hbm_to_vmem [thread:$0]  %s0, 1024, %s32, [#allocation3], 128, 128, 8
    $region5: #{tpu_custom_call.1} parent=1 // pred_fallthru
      _
    // Predicated region
    $region6: #{tpu_custom_call.1} parent=1 // pred_check
      _
    $region7: #{tpu_custom_call.1} parent=1 // pred_check_branch
      %39 = sbr.rel (0) target = $region9
    $region8: #{tpu_custom_call.1} parent=1 // pred_region
      %s41 = ssub.s32 384, 384
      %42 = vsyncadd [#allocation6], %s41
      %s43 = sshll.u32 [#allocation5], 4
      %s44 = int_to_ptr.vmem [resolvable:$true] %s43
      %49 = dma.hbm_to_vmem [thread:$0]  %s1, 384, %s44, [#allocation6], 64, 64, 4
    $region9: #{tpu_custom_call.1} parent=1 // pred_fallthru
      _
    // Predicated region
    $region10: #{tpu_custom_call.1} parent=1 // pred_check
      _
    $region11: #{tpu_custom_call.1} parent=1 // pred_check_branch
      %51 = sbr.rel (0) target = $region13
    $region12: #{tpu_custom_call.1} parent=1 // pred_region
      %s53 = ssub.s32 512, 512
      %54 = vsyncadd [#allocation6], %s53
      %s55 = sshll.u32 [#allocation7], 4
      %s56 = int_to_ptr.vmem [resolvable:$true] %s55
      %61 = dma.hbm_to_vmem [thread:$0]  %s2, 512, %s56, [#allocation6], 128, 128, 8
    $region13: #{tpu_custom_call.1} parent=1 // pred_fallthru
      _
    // Predicated region
    $region14: #{tpu_custom_call.1} parent=1 // pred_check
      _
    $region15: #{tpu_custom_call.1} parent=1 // pred_check_branch
      %63 = sbr.rel (0) target = $region17
    $region16: #{tpu_custom_call.1} parent=1 // pred_region
      _
    $region17: #{tpu_custom_call.1} parent=1 // pred_fallthru
      _
    // Predicated region
    $region18: #{tpu_custom_call.1} parent=1 // pred_check
      _
    $region19: #{tpu_custom_call.1} parent=1 // pred_check_branch
      %65 = sbr.rel (0) target = $region21
    $region20: #{tpu_custom_call.1} parent=1 // pred_region
      %s67 = ssub.s32 512, 512
      %68 = vsyncadd [#allocation9], %s67
      %s69 = sshll.u32 [#allocation8], 4
      %s70 = int_to_ptr.vmem [resolvable:$true] %s69
      %75 = dma.hbm_to_vmem [thread:$0]  %s4, 512, %s70, [#allocation9], 128, 128, 8
    $region21: #{tpu_custom_call.1} parent=1 // pred_fallthru
      _
    // Predicated region
    $region22: #{tpu_custom_call.1} parent=1 // pred_check
      _
    $region23: #{tpu_custom_call.1} parent=1 // pred_check_branch
      %77 = sbr.rel (0) target = $region25
    $region24: #{tpu_custom_call.1} parent=1 // pred_region
      _
    $region25: #{tpu_custom_call.1} parent=1 // pred_fallthru
      _
    // Predicated region
    $region26: #{tpu_custom_call.1} parent=1 // pred_check
      _
    $region27: #{tpu_custom_call.1} parent=1 // pred_check_branch
      %79 = sbr.rel (0) target = $region29
    $region28: #{tpu_custom_call.1} parent=1 // pred_region
      %s81 = ssub.s32 512, 512
      %82 = vsyncadd [#allocation9], %s81
      %s83 = sshll.u32 [#allocation10], 4
      %s84 = int_to_ptr.vmem [resolvable:$true] %s83
      %89 = dma.hbm_to_vmem [thread:$0]  %s6, 512, %s84, [#allocation9], 128, 128, 8
    $region29: #{tpu_custom_call.1} parent=1 // pred_fallthru
      _
    // Predicated region
    $region30: #{tpu_custom_call.1} parent=1 // pred_check
      _
    $region31: #{tpu_custom_call.1} parent=1 // pred_check_branch
      %91 = sbr.rel (0) target = $region33
    $region32: #{tpu_custom_call.1} parent=1 // pred_region
      _
    $region33: #{tpu_custom_call.1} parent=1 // pred_fallthru
      _
    // Predicated region
    $region34: #{tpu_custom_call.1} parent=1 // pred_check
      _
    $region35: #{tpu_custom_call.1} parent=1 // pred_check_branch
      %93 = sbr.rel (0) target = $region37
    $region36: #{tpu_custom_call.1} parent=1 // pred_region
      %s95 = ssub.s32 512, 512
      %96 = vsyncadd [#allocation12], %s95
      %s97 = sshll.u32 [#allocation11], 4
      %s98 = int_to_ptr.vmem [resolvable:$true] %s97
      %103 = dma.hbm_to_vmem [thread:$0]  %s8, 512, %s98, [#allocation12], 128, 128, 8
    $region37: #{tpu_custom_call.1} parent=1 // pred_fallthru
      _
    // Predicated region
    $region38: #{tpu_custom_call.1} parent=1 // pred_check
      _
    $region39: #{tpu_custom_call.1} parent=1 // pred_check_branch
      %105 = sbr.rel (0) target = $region41
    $region40: #{tpu_custom_call.1} parent=1 // pred_region
      _
    $region41: #{tpu_custom_call.1} parent=1 // pred_fallthru
      _
    // Predicated region
    $region42: #{tpu_custom_call.1} parent=1 // pred_check
      _
    $region43: #{tpu_custom_call.1} parent=1 // pred_check_branch
      %107 = sbr.rel (0) target = $region45
    $region44: #{tpu_custom_call.1} parent=1 // pred_region
      %108 = dma.done [#allocation3], 1024
    $region45: #{tpu_custom_call.1} parent=1 // pred_fallthru
      _
    // Predicated region
    $region46: #{tpu_custom_call.1} parent=1 // pred_check
      _
    $region47: #{tpu_custom_call.1} parent=1 // pred_check_branch
      %110 = sbr.rel (0) target = $region49
    $region48: #{tpu_custom_call.1} parent=1 // pred_region
      %111 = dma.done [#allocation6], 384
    $region49: #{tpu_custom_call.1} parent=1 // pred_fallthru
      _
    // Predicated region
    $region50: #{tpu_custom_call.1} parent=1 // pred_check
      _
    $region51: #{tpu_custom_call.1} parent=1 // pred_check_branch
      %113 = sbr.rel (0) target = $region53
    $region52: #{tpu_custom_call.1} parent=1 // pred_region
      %114 = dma.done [#allocation6], 512
    $region53: #{tpu_custom_call.1} parent=1 // pred_fallthru
      _
    // Predicated region
    $region54: #{tpu_custom_call.1} parent=1 // pred_check
      _
    $region55: #{tpu_custom_call.1} parent=1 // pred_check_branch
      %116 = sbr.rel (0) target = $region57
    $region56: #{tpu_custom_call.1} parent=1 // pred_region
      %117 = dma.done [#allocation9], 512
    $region57: #{tpu_custom_call.1} parent=1 // pred_fallthru
      _
    // Predicated region
    $region58: #{tpu_custom_call.1} parent=1 // pred_check
      _
    $region59: #{tpu_custom_call.1} parent=1 // pred_check_branch
      %119 = sbr.rel (0) target = $region61
    $region60: #{tpu_custom_call.1} parent=1 // pred_region
      %120 = dma.done [#allocation9], 512
    $region61: #{tpu_custom_call.1} parent=1 // pred_fallthru
      _
    // Predicated region
    $region62: #{tpu_custom_call.1} parent=1 // pred_check
      _
    $region63: #{tpu_custom_call.1} parent=1 // pred_check_branch
      %122 = sbr.rel (0) target = $region65
    $region64: #{tpu_custom_call.1} parent=1 // pred_region
      %123 = dma.done [#allocation12], 512
    $region65: #{tpu_custom_call.1} parent=1 // pred_fallthru
      _
    %v124 = vld [vmem:[#allocation2] sm:$0xff]
    %v125 = vld [vmem:[#allocation2 + $0x8] sm:$0xff]
    %v126 = vld [vmem:[#allocation2 + $0x10] sm:$0xff]
    %v127 = vld [vmem:[#allocation2 + $0x18] sm:$0xff]
    %v128 = vld [vmem:[#allocation2 + $0x20] sm:$0xff]
    %v129 = vld [vmem:[#allocation2 + $0x28] sm:$0xff]
    %v130 = vld [vmem:[#allocation2 + $0x30] sm:$0xff]
    %v131 = vld [vmem:[#allocation2 + $0x38] sm:$0xff]
    %vm132 = vcmask 261120
    %v133 = vsel %vm132, %v124, 0.0
    %v134 = vsel %vm132, %v125, 0.0
    %v135 = vadd.f32 %v133, %v134
    %v136 = vrot.slane %v135, 4
    %v137 = vadd.f32 %v135, %v136
    %v138 = vrot.slane %v137, 2
    %v139 = vadd.f32 %v137, %v138
    %v140 = vrot.slane %v139, 1
    %v141 = vadd.f32 %v139, %v140
    %v142 = vsel %vm132, %v126, 0.0
    %v143 = vsel %vm132, %v127, 0.0
    %v144 = vadd.f32 %v142, %v143
    %v145 = vrot.slane %v144, 4
    %v146 = vadd.f32 %v144, %v145
    %v147 = vrot.slane %v146, 2
    %v148 = vadd.f32 %v146, %v147
    %v149 = vrot.slane %v148, 1
    %v150 = vadd.f32 %v148, %v149
    %v151 = vsel %vm132, %v128, 0.0
    %v152 = vsel %vm132, %v129, 0.0
    %v153 = vadd.f32 %v151, %v152
    %v154 = vrot.slane %v153, 4
    %v155 = vadd.f32 %v153, %v154
    %v156 = vrot.slane %v155, 2
    %v157 = vadd.f32 %v155, %v156
    %v158 = vrot.slane %v157, 1
    %v159 = vadd.f32 %v157, %v158
    %v160 = vsel %vm132, %v130, 0.0
    %v161 = vsel %vm132, %v131, 0.0
    %v162 = vadd.f32 %v160, %v161
    %v163 = vrot.slane %v162, 4
    %v164 = vadd.f32 %v162, %v163
    %v165 = vrot.slane %v164, 2
    %v166 = vadd.f32 %v164, %v165
    %v167 = vrot.slane %v166, 1
    %v168 = vadd.f32 %v166, %v167
    %v169 = vrcp.pop 16.0
    %v170 = vmul.f32 %v141, %v169
    %v171 = vmul.f32 %v150, %v169
    %v172 = vmul.f32 %v159, %v169
    %v173 = vmul.f32 %v168, %v169
    %v174 = vld [vmem:[#allocation7] sm:$0xff]
    %v175 = vld [vmem:[#allocation7 + $0x8] sm:$0xff]
    %v176 = vld [vmem:[#allocation7 + $0x10] sm:$0xff]
    %v177 = vld [vmem:[#allocation7 + $0x18] sm:$0xff]
    %v178 = vld [vmem:[%s3] sm:$0x1]
    %v180 = vlaneseq
    %v181 = vshrl.u32 %v180, 7
    %v182 = vsub.s32 0, %v181
    %v183 = vrot.slane %v178, %v182
    %vm189 = vcmask 1041409
    %v190 = vsel %vm189, %v171, %v170
    %vm191 = vcmask 1042434
    %v192 = vsel %vm191, %v172, %v190
    %vm193 = vcmask 1043459
    %v194 = vsel %vm193, %v173, %v192
    %v195 = vsel %vm132, %v194, 0
    %197 = vmatprep.subr.mxu0 0.0
    %198 = vmatpush1.msra.mxu0 %v174
    %199 = vmatprep.subr.mxu0 0.0
    %200 = vmatpush1.msra.mxu0 %v175
    %201 = vmatprep.subr.mxu0 0.0
    %202 = vmatpush1.msra.mxu0 %v176
    %203 = vmatprep.subr.mxu0 0.0
    %204 = vmatpush1.msra.mxu0 %v177
    %205 = vmatprep.subr.mxu0 0.0
    %206 = vmatpush1.msra.mxu0 0.0
    %207 = vmatprep.subr.mxu0 0.0
    %208 = vmatpush1.msra.mxu0 0.0
    %209 = vmatprep.subr.mxu0 0.0
    %210 = vmatpush1.msra.mxu0 0.0
    %211 = vmatprep.subr.mxu0 0.0
    %212 = vmatpush1.msra.mxu0 0.0
    %213 = vmatprep.subr.mxu0 0.0
    %214 = vmatpush1.msra.mxu0 0.0
    %215 = vmatprep.subr.mxu0 0.0
    %216 = vmatpush1.msra.mxu0 0.0
    %217 = vmatprep.subr.mxu0 0.0
    %218 = vmatpush1.msra.mxu0 0.0
    %219 = vmatprep.subr.mxu0 0.0
    %220 = vmatpush1.msra.mxu0 0.0
    %221 = vmatprep.subr.mxu0 0.0
    %222 = vmatpush1.msra.mxu0 0.0
    %223 = vmatprep.subr.mxu0 0.0
    %224 = vmatpush1.msra.mxu0 0.0
    %225 = vmatprep.subr.mxu0 0.0
    %226 = vmatpush1.msra.mxu0 0.0
    %227 = vmatprep.subr.mxu0 0.0
    %228 = vmatpush1.msra.mxu0 0.0
    %229 = vmatprep.subr.mxu0 0.0
    %230 = vmatpush1.msra.mxu0 0.0
    %231 = vmatprep.subr.mxu0 0.0
    %232 = vmatpush1.msra.mxu0 0.0
    %233 = vmatprep.subr.mxu0 0.0
    %234 = vmatpush1.msra.mxu0 0.0
    %235 = vmatprep.subr.mxu0 0.0
    %236 = vmatpush1.msra.mxu0 0.0
    %237 = vmatprep.subr.mxu0 0.0
    %238 = vmatpush1.msra.mxu0 0.0
    %239 = vmatprep.subr.mxu0 0.0
    %240 = vmatpush1.msra.mxu0 0.0
    %241 = vmatprep.subr.mxu0 0.0
    %242 = vmatpush1.msra.mxu0 0.0
    %243 = vmatprep.subr.mxu0 0.0
    %244 = vmatpush1.msra.mxu0 0.0
    %245 = vmatprep.subr.mxu0 0.0
    %246 = vmatpush1.msra.mxu0 0.0
    %247 = vmatprep.subr.mxu0 0.0
    %248 = vmatpush1.msra.mxu0 0.0
    %249 = vmatprep.subr.mxu0 0.0
    %250 = vmatpush1.msra.mxu0 0.0
    %251 = vmatprep.subr.mxu0 0.0
    %252 = vmatpush1.msra.mxu0 0.0
    %253 = vmatprep.subr.mxu0 0.0
    %254 = vmatpush1.msra.mxu0 0.0
    %255 = vmatprep.subr.mxu0 0.0
    %256 = vmatpush1.msra.mxu0 0.0
    %257 = vmatprep.subr.mxu0 0.0
    %258 = vmatpush1.msra.mxu0 0.0
    %259 = vmatprep.subr.mxu0 0.0
    %260 = vmatpush1.msra.mxu0 0.0
    %261 = vmatprep.mubr.f32.mxu0 0.0
    %262 = vmatmul.mubr.f32.gmra.mrb[0].mxu0 %v195
    %v263 = vpop.f32.mrb[0].mxu0
    %v264 = vadd.f32 %v183, %v263
    %v265 = vpop.f32.mrb[0].mxu0
    %266 = vdwg.mxu0
    %vm267 = vcmask 257024
    %268 = vst.msk [vmem:[#allocation13] sm:$0xf] %vm267, %v264
    %v269 = vld [vmem:[#allocation8] sm:$0xff]
    %v270 = vld [vmem:[#allocation8 + $0x8] sm:$0xff]
    %v271 = vld [vmem:[#allocation8 + $0x10] sm:$0xff]
    %v272 = vld [vmem:[#allocation8 + $0x18] sm:$0xff]
    %v273 = vld [vmem:[%s5] sm:$0x1]
    %v275 = vlaneseq
    %v276 = vshrl.u32 %v275, 7
    %v277 = vsub.s32 0, %v276
    %v278 = vrot.slane %v273, %v277
    %280 = vmatprep.subr.mxu0 0.0
    %281 = vmatpush1.msra.mxu0 %v269
    %282 = vmatprep.subr.mxu0 0.0
    %283 = vmatpush1.msra.mxu0 %v270
    %284 = vmatprep.subr.mxu0 0.0
    %285 = vmatpush1.msra.mxu0 %v271
    %286 = vmatprep.subr.mxu0 0.0
    %287 = vmatpush1.msra.mxu0 %v272
    %288 = vmatprep.subr.mxu0 0.0
    %289 = vmatpush1.msra.mxu0 0.0
    %290 = vmatprep.subr.mxu0 0.0
    %291 = vmatpush1.msra.mxu0 0.0
    %292 = vmatprep.subr.mxu0 0.0
    %293 = vmatpush1.msra.mxu0 0.0
    %294 = vmatprep.subr.mxu0 0.0
    %295 = vmatpush1.msra.mxu0 0.0
    %296 = vmatprep.subr.mxu0 0.0
    %297 = vmatpush1.msra.mxu0 0.0
    %298 = vmatprep.subr.mxu0 0.0
    %299 = vmatpush1.msra.mxu0 0.0
    %300 = vmatprep.subr.mxu0 0.0
    %301 = vmatpush1.msra.mxu0 0.0
    %302 = vmatprep.subr.mxu0 0.0
    %303 = vmatpush1.msra.mxu0 0.0
    %304 = vmatprep.subr.mxu0 0.0
    %305 = vmatpush1.msra.mxu0 0.0
    %306 = vmatprep.subr.mxu0 0.0
    %307 = vmatpush1.msra.mxu0 0.0
    %308 = vmatprep.subr.mxu0 0.0
    %309 = vmatpush1.msra.mxu0 0.0
    %310 = vmatprep.subr.mxu0 0.0
    %311 = vmatpush1.msra.mxu0 0.0
    %312 = vmatprep.subr.mxu0 0.0
    %313 = vmatpush1.msra.mxu0 0.0
    %314 = vmatprep.subr.mxu0 0.0
    %315 = vmatpush1.msra.mxu0 0.0
    %316 = vmatprep.subr.mxu0 0.0
    %317 = vmatpush1.msra.mxu0 0.0
    %318 = vmatprep.subr.mxu0 0.0
    %319 = vmatpush1.msra.mxu0 0.0
    %320 = vmatprep.subr.mxu0 0.0
    %321 = vmatpush1.msra.mxu0 0.0
    %322 = vmatprep.subr.mxu0 0.0
    %323 = vmatpush1.msra.mxu0 0.0
    %324 = vmatprep.subr.mxu0 0.0
    %325 = vmatpush1.msra.mxu0 0.0
    %326 = vmatprep.subr.mxu0 0.0
    %327 = vmatpush1.msra.mxu0 0.0
    %328 = vmatprep.subr.mxu0 0.0
    %329 = vmatpush1.msra.mxu0 0.0
    %330 = vmatprep.subr.mxu0 0.0
    %331 = vmatpush1.msra.mxu0 0.0
    %332 = vmatprep.subr.mxu0 0.0
    %333 = vmatpush1.msra.mxu0 0.0
    %334 = vmatprep.subr.mxu0 0.0
    %335 = vmatpush1.msra.mxu0 0.0
    %336 = vmatprep.subr.mxu0 0.0
    %337 = vmatpush1.msra.mxu0 0.0
    %338 = vmatprep.subr.mxu0 0.0
    %339 = vmatpush1.msra.mxu0 0.0
    %340 = vmatprep.subr.mxu0 0.0
    %341 = vmatpush1.msra.mxu0 0.0
    %342 = vmatprep.subr.mxu0 0.0
    %343 = vmatpush1.msra.mxu0 0.0
    %344 = vmatprep.mubr.f32.mxu0 0.0
    %345 = vmatmul.mubr.f32.gmra.mrb[0].mxu0 %v195
    %v346 = vpop.f32.mrb[0].mxu0
    %v347 = vadd.f32 %v278, %v346
    %v348 = vpop.f32.mrb[0].mxu0
    %349 = vdwg.mxu0
    %350 = vst.msk [vmem:[#allocation14] sm:$0xf] %vm267, %v347
    %v351 = vld [vmem:[#allocation10] sm:$0xff]
    %v352 = vld [vmem:[#allocation10 + $0x8] sm:$0xff]
    %v353 = vld [vmem:[#allocation10 + $0x10] sm:$0xff]
    %v354 = vld [vmem:[#allocation10 + $0x18] sm:$0xff]
    %v355 = vld [vmem:[%s7] sm:$0x1]
    %v357 = vlaneseq
    %v358 = vshrl.u32 %v357, 7
    %v359 = vsub.s32 0, %v358
    %v360 = vrot.slane %v355, %v359
    %v363 = vsel %vm132, %v124, 0
    %v366 = vsel %vm132, %v125, 0
    %v369 = vsel %vm132, %v126, 0
    %v372 = vsel %vm132, %v127, 0
    %v375 = vsel %vm132, %v128, 0
    %v378 = vsel %vm132, %v129, 0
    %v381 = vsel %vm132, %v130, 0
    %v384 = vsel %vm132, %v131, 0
    %386 = vmatprep.subr.mxu0 0.0
    %387 = vmatpush1.msra.mxu0 %v351
    %388 = vmatprep.subr.mxu0 0.0
    %389 = vmatpush1.msra.mxu0 %v352
    %390 = vmatprep.subr.mxu0 0.0
    %391 = vmatpush1.msra.mxu0 %v353
    %392 = vmatprep.subr.mxu0 0.0
    %393 = vmatpush1.msra.mxu0 %v354
    %394 = vmatprep.subr.mxu0 0.0
    %395 = vmatpush1.msra.mxu0 0.0
    %396 = vmatprep.subr.mxu0 0.0
    %397 = vmatpush1.msra.mxu0 0.0
    %398 = vmatprep.subr.mxu0 0.0
    %399 = vmatpush1.msra.mxu0 0.0
    %400 = vmatprep.subr.mxu0 0.0
    %401 = vmatpush1.msra.mxu0 0.0
    %402 = vmatprep.subr.mxu0 0.0
    %403 = vmatpush1.msra.mxu0 0.0
    %404 = vmatprep.subr.mxu0 0.0
    %405 = vmatpush1.msra.mxu0 0.0
    %406 = vmatprep.subr.mxu0 0.0
    %407 = vmatpush1.msra.mxu0 0.0
    %408 = vmatprep.subr.mxu0 0.0
    %409 = vmatpush1.msra.mxu0 0.0
    %410 = vmatprep.subr.mxu0 0.0
    %411 = vmatpush1.msra.mxu0 0.0
    %412 = vmatprep.subr.mxu0 0.0
    %413 = vmatpush1.msra.mxu0 0.0
    %414 = vmatprep.subr.mxu0 0.0
    %415 = vmatpush1.msra.mxu0 0.0
    %416 = vmatprep.subr.mxu0 0.0
    %417 = vmatpush1.msra.mxu0 0.0
    %418 = vmatprep.subr.mxu0 0.0
    %419 = vmatpush1.msra.mxu0 0.0
    %420 = vmatprep.subr.mxu0 0.0
    %421 = vmatpush1.msra.mxu0 0.0
    %422 = vmatprep.subr.mxu0 0.0
    %423 = vmatpush1.msra.mxu0 0.0
    %424 = vmatprep.subr.mxu0 0.0
    %425 = vmatpush1.msra.mxu0 0.0
    %426 = vmatprep.subr.mxu0 0.0
    %427 = vmatpush1.msra.mxu0 0.0
    %428 = vmatprep.subr.mxu0 0.0
    %429 = vmatpush1.msra.mxu0 0.0
    %430 = vmatprep.subr.mxu0 0.0
    %431 = vmatpush1.msra.mxu0 0.0
    %432 = vmatprep.subr.mxu0 0.0
    %433 = vmatpush1.msra.mxu0 0.0
    %434 = vmatprep.subr.mxu0 0.0
    %435 = vmatpush1.msra.mxu0 0.0
    %436 = vmatprep.subr.mxu0 0.0
    %437 = vmatpush1.msra.mxu0 0.0
    %438 = vmatprep.subr.mxu0 0.0
    %439 = vmatpush1.msra.mxu0 0.0
    %440 = vmatprep.subr.mxu0 0.0
    %441 = vmatpush1.msra.mxu0 0.0
    %442 = vmatprep.subr.mxu0 0.0
    %443 = vmatpush1.msra.mxu0 0.0
    %444 = vmatprep.subr.mxu0 0.0
    %445 = vmatpush1.msra.mxu0 0.0
    %446 = vmatprep.subr.mxu0 0.0
    %447 = vmatpush1.msra.mxu0 0.0
    %448 = vmatprep.subr.mxu0 0.0
    %449 = vmatpush1.msra.mxu0 0.0
    %450 = vmatprep.mubr.f32.mxu0 0.0
    %451 = vmatmul.mubr.f32.gmra.mrb[0].mxu0 %v363
    %v452 = vpop.f32.mrb[0].mxu0
    %v453 = vadd.f32 %v360, %v452
    %v454 = vpop.f32.mrb[0].mxu0
    %455 = vmatprep.mubr.f32.mxu0 0.0
    %456 = vmatmul.mubr.f32.gmra.mrb[0].mxu0 %v366
    %v457 = vpop.f32.mrb[0].mxu0
    %v458 = vadd.f32 %v360, %v457
    %v459 = vpop.f32.mrb[0].mxu0
    %460 = vmatprep.mubr.f32.mxu0 0.0
    %461 = vmatmul.mubr.f32.gmra.mrb[0].mxu0 %v369
    %v462 = vpop.f32.mrb[0].mxu0
    %v463 = vadd.f32 %v360, %v462
    %v464 = vpop.f32.mrb[0].mxu0
    %465 = vmatprep.mubr.f32.mxu0 0.0
    %466 = vmatmul.mubr.f32.gmra.mrb[0].mxu0 %v372
    %v467 = vpop.f32.mrb[0].mxu0
    %v468 = vadd.f32 %v360, %v467
    %v469 = vpop.f32.mrb[0].mxu0
    %470 = vmatprep.mubr.f32.mxu0 0.0
    %471 = vmatmul.mubr.f32.gmra.mrb[0].mxu0 %v375
    %v472 = vpop.f32.mrb[0].mxu0
    %v473 = vadd.f32 %v360, %v472
    %v474 = vpop.f32.mrb[0].mxu0
    %475 = vmatprep.mubr.f32.mxu0 0.0
    %476 = vmatmul.mubr.f32.gmra.mrb[0].mxu0 %v378
    %v477 = vpop.f32.mrb[0].mxu0
    %v478 = vadd.f32 %v360, %v477
    %v479 = vpop.f32.mrb[0].mxu0
    %480 = vmatprep.mubr.f32.mxu0 0.0
    %481 = vmatmul.mubr.f32.gmra.mrb[0].mxu0 %v381
    %v482 = vpop.f32.mrb[0].mxu0
    %v483 = vadd.f32 %v360, %v482
    %v484 = vpop.f32.mrb[0].mxu0
    %485 = vmatprep.mubr.f32.mxu0 0.0
    %486 = vmatmul.mubr.f32.gmra.mrb[0].mxu0 %v384
    %v487 = vpop.f32.mrb[0].mxu0
    %v488 = vadd.f32 %v360, %v487
    %v489 = vpop.f32.mrb[0].mxu0
    %490 = vdwg.mxu0
    %491 = vst.msk [vmem:[#allocation16] sm:$0xff] %vm132, %v453
    %492 = vst.msk [vmem:[#allocation16 + $0x8] sm:$0xff] %vm132, %v458
    %493 = vst.msk [vmem:[#allocation16 + $0x10] sm:$0xff] %vm132, %v463
    %494 = vst.msk [vmem:[#allocation16 + $0x18] sm:$0xff] %vm132, %v468
    %495 = vst.msk [vmem:[#allocation16 + $0x20] sm:$0xff] %vm132, %v473
    %496 = vst.msk [vmem:[#allocation16 + $0x28] sm:$0xff] %vm132, %v478
    %497 = vst.msk [vmem:[#allocation16 + $0x30] sm:$0xff] %vm132, %v483
    %498 = vst.msk [vmem:[#allocation16 + $0x38] sm:$0xff] %vm132, %v488
    %v499 = vld [vmem:[#allocation5] sm:$0xf]
    %v500 = vld [vmem:[#allocation5 + $0x4] sm:$0xf]
    %v501 = vld [vmem:[#allocation5 + $0x8] sm:$0xf]
    %v502 = vld [vmem:[#allocation5 + $0xc] sm:$0xf]
    %v503 = vld [vmem:[#allocation5 + $0x10] sm:$0xf]
    %v504 = vld [vmem:[#allocation5 + $0x14] sm:$0xf]
    %v505 = vld [vmem:[#allocation11] sm:$0xff]
    %v506 = vld [vmem:[#allocation11 + $0x8] sm:$0xff]
    %v507 = vld [vmem:[#allocation11 + $0x10] sm:$0xff]
    %v508 = vld [vmem:[#allocation11 + $0x18] sm:$0xff]
    %v509 = vld [vmem:[%s9] sm:$0x1]
    %v511 = vlaneseq
    %v512 = vshrl.u32 %v511, 7
    %v513 = vsub.s32 0, %v512
    %v514 = vrot.slane %v509, %v513
    %v522 = vcombine.low %v499, %v500
    %v523 = vcombine.low %v501, %v502
    %v524 = vcombine.low %v503, %v504
    %v525 = vsel %vm132, %v522, 0
    %v527 = vsel %vm132, %v523, 0
    %v529 = vsel %vm132, %v524, 0
    %531 = vmatprep.subr.mxu0 0.0
    %532 = vmatpush1.msra.mxu0 %v505
    %533 = vmatprep.subr.mxu0 0.0
    %534 = vmatpush1.msra.mxu0 %v506
    %535 = vmatprep.subr.mxu0 0.0
    %536 = vmatpush1.msra.mxu0 %v507
    %537 = vmatprep.subr.mxu0 0.0
    %538 = vmatpush1.msra.mxu0 %v508
    %539 = vmatprep.subr.mxu0 0.0
    %540 = vmatpush1.msra.mxu0 0.0
    %541 = vmatprep.subr.mxu0 0.0
    %542 = vmatpush1.msra.mxu0 0.0
    %543 = vmatprep.subr.mxu0 0.0
    %544 = vmatpush1.msra.mxu0 0.0
    %545 = vmatprep.subr.mxu0 0.0
    %546 = vmatpush1.msra.mxu0 0.0
    %547 = vmatprep.subr.mxu0 0.0
    %548 = vmatpush1.msra.mxu0 0.0
    %549 = vmatprep.subr.mxu0 0.0
    %550 = vmatpush1.msra.mxu0 0.0
    %551 = vmatprep.subr.mxu0 0.0
    %552 = vmatpush1.msra.mxu0 0.0
    %553 = vmatprep.subr.mxu0 0.0
    %554 = vmatpush1.msra.mxu0 0.0
    %555 = vmatprep.subr.mxu0 0.0
    %556 = vmatpush1.msra.mxu0 0.0
    %557 = vmatprep.subr.mxu0 0.0
    %558 = vmatpush1.msra.mxu0 0.0
    %559 = vmatprep.subr.mxu0 0.0
    %560 = vmatpush1.msra.mxu0 0.0
    %561 = vmatprep.subr.mxu0 0.0
    %562 = vmatpush1.msra.mxu0 0.0
    %563 = vmatprep.subr.mxu0 0.0
    %564 = vmatpush1.msra.mxu0 0.0
    %565 = vmatprep.subr.mxu0 0.0
    %566 = vmatpush1.msra.mxu0 0.0
    %567 = vmatprep.subr.mxu0 0.0
    %568 = vmatpush1.msra.mxu0 0.0
    %569 = vmatprep.subr.mxu0 0.0
    %570 = vmatpush1.msra.mxu0 0.0
    %571 = vmatprep.subr.mxu0 0.0
    %572 = vmatpush1.msra.mxu0 0.0
    %573 = vmatprep.subr.mxu0 0.0
    %574 = vmatpush1.msra.mxu0 0.0
    %575 = vmatprep.subr.mxu0 0.0
    %576 = vmatpush1.msra.mxu0 0.0
    %577 = vmatprep.subr.mxu0 0.0
    %578 = vmatpush1.msra.mxu0 0.0
    %579 = vmatprep.subr.mxu0 0.0
    %580 = vmatpush1.msra.mxu0 0.0
    %581 = vmatprep.subr.mxu0 0.0
    %582 = vmatpush1.msra.mxu0 0.0
    %583 = vmatprep.subr.mxu0 0.0
    %584 = vmatpush1.msra.mxu0 0.0
    %585 = vmatprep.subr.mxu0 0.0
    %586 = vmatpush1.msra.mxu0 0.0
    %587 = vmatprep.subr.mxu0 0.0
    %588 = vmatpush1.msra.mxu0 0.0
    %589 = vmatprep.subr.mxu0 0.0
    %590 = vmatpush1.msra.mxu0 0.0
    %591 = vmatprep.subr.mxu0 0.0
    %592 = vmatpush1.msra.mxu0 0.0
    %593 = vmatprep.subr.mxu0 0.0
    %594 = vmatpush1.msra.mxu0 0.0
    %595 = vmatprep.mubr.f32.mxu0 0.0
    %596 = vmatmul.mubr.f32.gmra.mrb[0].mxu0 %v525
    %v597 = vpop.f32.mrb[0].mxu0
    %v598 = vadd.f32 %v514, %v597
    %v599 = vpop.f32.mrb[0].mxu0
    %600 = vmatprep.mubr.f32.mxu0 0.0
    %601 = vmatmul.mubr.f32.gmra.mrb[0].mxu0 %v527
    %v602 = vpop.f32.mrb[0].mxu0
    %v603 = vadd.f32 %v514, %v602
    %v604 = vpop.f32.mrb[0].mxu0
    %605 = vmatprep.mubr.f32.mxu0 0.0
    %606 = vmatmul.mubr.f32.gmra.mrb[0].mxu0 %v529
    %v607 = vpop.f32.mrb[0].mxu0
    %v608 = vadd.f32 %v514, %v607
    %v609 = vpop.f32.mrb[0].mxu0
    %610 = vdwg.mxu0
    %v614 = vcombine.high %v598, %v598
    %v615 = vcombine.high %v603, %v603
    %v616 = vcombine.high %v608, %v608
    %620 = vst [vmem:[#allocation17] sm:$0xf] %v598
    %621 = vst [vmem:[#allocation17 + $0x4] sm:$0xf] %v614
    %622 = vst [vmem:[#allocation17 + $0x8] sm:$0xf] %v603
    %623 = vst [vmem:[#allocation17 + $0xc] sm:$0xf] %v615
    %624 = vst [vmem:[#allocation17 + $0x10] sm:$0xf] %v608
    %625 = vst [vmem:[#allocation17 + $0x14] sm:$0xf] %v616
    // Predicated region
    $region66: #{tpu_custom_call.1} parent=1 // pred_check
      _
    $region67: #{tpu_custom_call.1} parent=1 // pred_check_branch
      %627 = sbr.rel (0) target = $region69
    $region68: #{tpu_custom_call.1} parent=1 // pred_region
      %s629 = ssub.s32 64, 64
      %630 = vsyncadd [#allocation4], %s629
      %s632 = sshll.u32 [#allocation13], 4
      %s633 = int_to_ptr.vmem [resolvable:$true] %s632
      %635 = dma.vmem_to_hbm [thread:$0]  %s633, 64, %s10, [#allocation4]
    $region69: #{tpu_custom_call.1} parent=1 // pred_fallthru
      _
    // Predicated region
    $region70: #{tpu_custom_call.1} parent=1 // pred_check
      _
    $region71: #{tpu_custom_call.1} parent=1 // pred_check_branch
      %637 = sbr.rel (0) target = $region73
    $region72: #{tpu_custom_call.1} parent=1 // pred_region
      %s639 = ssub.s32 64, 64
      %640 = vsyncadd [#allocation15], %s639
      %s642 = sshll.u32 [#allocation14], 4
      %s643 = int_to_ptr.vmem [resolvable:$true] %s642
      %645 = dma.vmem_to_hbm [thread:$0]  %s643, 64, %s11, [#allocation15]
    $region73: #{tpu_custom_call.1} parent=1 // pred_fallthru
      _
    // Predicated region
    $region74: #{tpu_custom_call.1} parent=1 // pred_check
      _
    $region75: #{tpu_custom_call.1} parent=1 // pred_check_branch
      %647 = sbr.rel (0) target = $region77
    $region76: #{tpu_custom_call.1} parent=1 // pred_region
      %s649 = ssub.s32 1024, 1024
      %650 = vsyncadd [#allocation15], %s649
      %s651 = sshll.u32 [#allocation16], 4
      %s652 = int_to_ptr.vmem [resolvable:$true] %s651
      %657 = dma.vmem_to_hbm [thread:$0]  %s652, 1024, %s12, [#allocation15], 128, 128, 8
    $region77: #{tpu_custom_call.1} parent=1 // pred_fallthru
      _
    // Predicated region
    $region78: #{tpu_custom_call.1} parent=1 // pred_check
      _
    $region79: #{tpu_custom_call.1} parent=1 // pred_check_branch
      %659 = sbr.rel (0) target = $region81
    $region80: #{tpu_custom_call.1} parent=1 // pred_region
      %s661 = ssub.s32 384, 384
      %662 = vsyncadd [#allocation18], %s661
      %s663 = sshll.u32 [#allocation17], 4
      %s664 = int_to_ptr.vmem [resolvable:$true] %s663
      %669 = dma.vmem_to_hbm [thread:$0]  %s664, 384, %s13, [#allocation18], 64, 64, 4
    $region81: #{tpu_custom_call.1} parent=1 // pred_fallthru
      _
    // Predicated region
    $region82: #{tpu_custom_call.1} parent=1 // pred_check
      _
    $region83: #{tpu_custom_call.1} parent=1 // pred_check_branch
      %671 = sbr.rel (0) target = $region85
    $region84: #{tpu_custom_call.1} parent=1 // pred_region
      %672 = dma.done [#allocation4], 64
    $region85: #{tpu_custom_call.1} parent=1 // pred_fallthru
      _
    // Predicated region
    $region86: #{tpu_custom_call.1} parent=1 // pred_check
      _
    $region87: #{tpu_custom_call.1} parent=1 // pred_check_branch
      %674 = sbr.rel (0) target = $region89
    $region88: #{tpu_custom_call.1} parent=1 // pred_region
      %675 = dma.done [#allocation15], 64
    $region89: #{tpu_custom_call.1} parent=1 // pred_fallthru
      _
    // Predicated region
    $region90: #{tpu_custom_call.1} parent=1 // pred_check
      _
    $region91: #{tpu_custom_call.1} parent=1 // pred_check_branch
      %677 = sbr.rel (0) target = $region93
    $region92: #{tpu_custom_call.1} parent=1 // pred_region
      %678 = dma.done [#allocation15], 1024
    $region93: #{tpu_custom_call.1} parent=1 // pred_fallthru
      _
    // Predicated region
    $region94: #{tpu_custom_call.1} parent=1 // pred_check
      _
    $region95: #{tpu_custom_call.1} parent=1 // pred_check_branch
      %680 = sbr.rel (0) target = $region97
    $region96: #{tpu_custom_call.1} parent=1 // pred_region
      %681 = dma.done [#allocation18], 384
    $region97: #{tpu_custom_call.1} parent=1 // pred_fallthru
      _
    %682 = vsyncpa [#allocation3], 1
    %683 = vsyncpa [#allocation6], 1
    %684 = vsyncpa [#allocation9], 1
    %685 = vsyncpa [#allocation12], 1
    %686 = vsyncpa [#allocation4], 1
    %687 = vsyncpa [#allocation15], 1
    %688 = vsyncpa [#allocation18], 1

</llo_original>
